<compile_context>
chip_gen: v7x
topology: tpu7x:2x2x1
jax: 0.10.0
libtpu: 0.0.40
codegen_flags: <defaults>
</compile_context>

<pallas_src>
import functools
import math

import jax
import jax.numpy as jnp
from jax.experimental import pallas as pl
from jax.experimental.pallas import tpu as pltpu


def _layernorm_kernel(x_ref, g_ref, b_ref, o_ref, *, eps):
    # x_ref: (row_tile, F); g_ref/b_ref: (1, F); o_ref: (row_tile, F)
    x = x_ref[...].astype(jnp.float32)
    f = x.shape[-1]

    mean = jnp.mean(x, axis=-1, keepdims=True)
    xc = x - mean
    # Unbiased variance (Bessel's correction) to match torch.Tensor.std default.
    denom = jnp.float32(1.0 / max(f - 1, 1))
    var = jnp.sum(xc * xc, axis=-1, keepdims=True) * denom
    std = jnp.sqrt(var)

    # Exact divide (keeps the 1e-5 tolerance; kernel is HBM-bound so the VPU
    # divide is hidden under memory stalls anyway).
    inv = 1.0 / (std + jnp.float32(eps))
    y = g_ref[...].astype(jnp.float32) * (xc * inv) + b_ref[...].astype(jnp.float32)
    o_ref[...] = y.astype(o_ref.dtype)


def _round_up(v, m):
    return ((v + m - 1) // m) * m


def _pick_row_tile(rows, feat, itemsize):
    """Largest row tile whose ~4-block footprint fits a ~24 MiB VMEM budget."""
    budget_bytes = 24 * 1024 * 1024          # safe on v7x (64 MiB physical VMEM)
    max_rows = max(budget_bytes // (4 * feat * itemsize), 8)
    # Keep at least 2 grid steps when there is enough work (v7x megacore split).
    if rows > 256:
        max_rows = min(max_rows, _round_up(pl.cdiv(rows, 2), 32))
    tile = min(rows, max_rows)
    if tile >= 32:
        tile = (tile // 32) * 32              # multiple of 32: bf16/int8 safe too
    else:
        tile = _round_up(tile, 8)             # at least sublane-aligned for f32
    return max(tile, 8)


def layer_norm(x, gamma, beta, eps=1e-6):
    """LayerNorm over the last axis of `x`. gamma/beta have shape (F,)."""
    orig_shape = x.shape
    F = orig_shape[-1]
    R = int(math.prod(orig_shape[:-1])) if len(orig_shape) > 1 else 1

    x2 = x.reshape(R, F)
    g2 = gamma.reshape(1, F)
    b2 = beta.reshape(1, F)

    itemsize = jnp.dtype(x.dtype).itemsize
    tr = _pick_row_tile(R, F, itemsize)
    grid = (pl.cdiv(R, tr),)

    # Raise the scoped VMEM limit enough for the chosen tiles (double-buffered
    # in + out + gamma/beta + headroom), but never past v7x's 64 MiB physical.
    block_bytes = tr * F * itemsize
    vmem_bytes = int(min(max(6 * block_bytes + (1 << 20), 32 * 1024 * 1024),
                         60 * 1024 * 1024))

    out = pl.pallas_call(
        functools.partial(_layernorm_kernel, eps=eps),
        out_shape=jax.ShapeDtypeStruct((R, F), x.dtype),
        grid_spec=pltpu.PrefetchScalarGridSpec(
            num_scalar_prefetch=0,
            grid=grid,
            in_specs=[
                pl.BlockSpec((tr, F), lambda i: (i, 0)),   # x rows (partial last block masked)
                pl.BlockSpec((1, F), lambda i: (0, 0)),    # gamma (reused VMEM block)
                pl.BlockSpec((1, F), lambda i: (0, 0)),    # beta  (reused VMEM block)
            ],
            out_specs=pl.BlockSpec((tr, F), lambda i: (i, 0)),
        ),
        compiler_params=pltpu.CompilerParams(
            dimension_semantics=("parallel",),
            vmem_limit_bytes=vmem_bytes),
    )(x2, g2, b2)

    return out.reshape(orig_shape)


def _reference(x, gamma, beta, eps=1e-6):
    mean = jnp.mean(x, axis=-1, keepdims=True)
    std = jnp.std(x, axis=-1, keepdims=True, ddof=1)  # unbiased, like torch.std
    return gamma * (x - mean) / (std + eps) + beta


if __name__ == "__main__":
    # Small shapes consistent with the module: batch=2, seq=8, features=128
    # (features chosen lane-dense = multiple of 128).
    B, S, F = 2, 8, 128
    key0 = jax.random.PRNGKey(0)
    kx, kg, kb = jax.random.split(key0, 3)

    x = jax.random.normal(kx, (B, S, F), dtype=jnp.float32)
    gamma = 1.0 + 0.1 * jax.random.normal(kg, (F,), dtype=jnp.float32)
    beta = 0.1 * jax.random.normal(kb, (F,), dtype=jnp.float32)

    out = layer_norm(x, gamma, beta, eps=1e-6)
    jax.block_until_ready(out)

    ref = _reference(x, gamma, beta, eps=1e-6)
    assert out.shape == ref.shape
    assert jnp.allclose(out, ref, atol=1e-5, rtol=1e-5)

    print("KERNEL_OK")
</pallas_src>

<mosaic_0001>
module attributes {stable_mosaic.version = 11 : i64} {
  func.func @_layernorm_kernel(%arg0: i32, %arg1: memref<16x128xf32, #tpu.memory_space<vmem>>, %arg2: memref<1x128xf32, #tpu.memory_space<vmem>>, %arg3: memref<1x128xf32, #tpu.memory_space<vmem>>, %arg4: memref<16x128xf32, #tpu.memory_space<vmem>>) attributes {dimension_semantics = [#tpu.dimension_semantics<parallel>], iteration_bounds = array<i64: 1>, scalar_prefetch = 0 : i64, scratch_operands = 0 : i64, tpu.core_type = #tpu.core_type<tc>, window_params = [{transform_indices = @transform_0, window_bounds = array<i64: 16, 128>}, {pipeline_mode = #tpu.pipeline_mode<synchronous>, transform_indices = @transform_1, window_bounds = array<i64: 1, 128>}, {pipeline_mode = #tpu.pipeline_mode<synchronous>, transform_indices = @transform_2, window_bounds = array<i64: 1, 128>}, {transform_indices = @transform_3, window_bounds = array<i64: 16, 128>}]} {
    %c0 = arith.constant 0 : index
    %c0_0 = arith.constant 0 : index
    %0 = vector.load %arg1[%c0, %c0_0] : memref<16x128xf32, #tpu.memory_space<vmem>>, vector<16x128xf32>
    %cst = arith.constant dense<0.000000e+00> : vector<16xf32>
    %1 = vector.multi_reduction <add>, %0, %cst [1] : vector<16x128xf32> to vector<16xf32>
    %2 = vector.shape_cast %1 : vector<16xf32> to vector<16x1xf32>
    %cst_1 = arith.constant 1.280000e+02 : f32
    %3 = vector.broadcast %cst_1 : f32 to vector<16x1xf32>
    %4 = arith.divf %2, %3 : vector<16x1xf32>
    %5 = vector.broadcast %4 : vector<16x1xf32> to vector<16x128xf32>
    %6 = arith.subf %0, %5 : vector<16x128xf32>
    %7 = arith.mulf %6, %6 : vector<16x128xf32>
    %cst_2 = arith.constant dense<0.000000e+00> : vector<16xf32>
    %8 = vector.multi_reduction <add>, %7, %cst_2 [1] : vector<16x128xf32> to vector<16xf32>
    %9 = vector.shape_cast %8 : vector<16xf32> to vector<16x1xf32>
    %cst_3 = arith.constant 0.00787401571 : f32
    %10 = vector.broadcast %cst_3 : f32 to vector<16x1xf32>
    %11 = arith.mulf %9, %10 : vector<16x1xf32>
    %12 = math.sqrt %11 : vector<16x1xf32>
    %cst_4 = arith.constant 9.99999997E-7 : f32
    %13 = vector.broadcast %cst_4 : f32 to vector<16x1xf32>
    %14 = arith.addf %12, %13 : vector<16x1xf32>
    %cst_5 = arith.constant 1.000000e+00 : f32
    %15 = vector.broadcast %cst_5 : f32 to vector<16x1xf32>
    %16 = arith.divf %15, %14 : vector<16x1xf32>
    %c0_6 = arith.constant 0 : index
    %c0_7 = arith.constant 0 : index
    %17 = vector.load %arg2[%c0_6, %c0_7] : memref<1x128xf32, #tpu.memory_space<vmem>>, vector<1x128xf32>
    %18 = vector.broadcast %16 : vector<16x1xf32> to vector<16x128xf32>
    %19 = arith.mulf %6, %18 : vector<16x128xf32>
    %20 = vector.broadcast %17 : vector<1x128xf32> to vector<16x128xf32>
    %21 = arith.mulf %20, %19 : vector<16x128xf32>
    %c0_8 = arith.constant 0 : index
    %c0_9 = arith.constant 0 : index
    %22 = vector.load %arg3[%c0_8, %c0_9] : memref<1x128xf32, #tpu.memory_space<vmem>>, vector<1x128xf32>
    %23 = vector.broadcast %22 : vector<1x128xf32> to vector<16x128xf32>
    %24 = arith.addf %21, %23 : vector<16x128xf32>
    %c0_10 = arith.constant 0 : index
    %c0_11 = arith.constant 0 : index
    %25 = vector.load %arg4[%c0_10, %c0_11] : memref<16x128xf32, #tpu.memory_space<vmem>>, vector<16x128xf32>
    tpu.vector_store %arg4[%c0_10, %c0_11], %24 {strides = array<i32>} : memref<16x128xf32, #tpu.memory_space<vmem>>, vector<16x128xf32>,
    return
  }
  func.func @transform_0(%arg0: i32) -> (i32, i32) {
    %c0_i32 = arith.constant 0 : i32
    %c0_i32_0 = arith.constant 0 : i32
    return %arg0, %c0_i32 : i32, i32
  }
  func.func @transform_1(%arg0: i32) -> (i32, i32) {
    %c0_i32 = arith.constant 0 : i32
    %c0_i32_0 = arith.constant 0 : i32
    %c0_i32_1 = arith.constant 0 : i32
    return %c0_i32, %c0_i32_0 : i32, i32
  }
  func.func @transform_2(%arg0: i32) -> (i32, i32) {
    %c0_i32 = arith.constant 0 : i32
    %c0_i32_0 = arith.constant 0 : i32
    %c0_i32_1 = arith.constant 0 : i32
    return %c0_i32, %c0_i32_0 : i32, i32
  }
  func.func @transform_3(%arg0: i32) -> (i32, i32) {
    %c0_i32 = arith.constant 0 : i32
    %c0_i32_0 = arith.constant 0 : i32
    return %arg0, %c0_i32 : i32, i32
  }
}

</mosaic_0001>

<llo_original>
// kernel: tpu_custom_call.1
$region0: #{tpu_custom_call.1}
  #allocation0 [shape = 'u32[]', space=smem, size = 0x4, offset = 0x4, fixed_abs, tag = 'smem constant byte address 0x4 - core index']
  #allocation1 [shape = 'u32[144,128]{1,0:T(1,128)}', space=vmem, size = 0x12000, scoped, tag = 'internal scratch']
  %s0 = inlined_call_operand.hbm [shape: f32[16,128], index: 0, kind: input, shape index: {}]
  %s1 = inlined_call_operand.vmem [shape: f32[1,128], index: 1, kind: input, shape index: {}]
  %s2 = inlined_call_operand.vmem [shape: f32[1,128], index: 2, kind: input, shape index: {}]
  %s3 = inlined_call_operand.hbm [shape: f32[16,128], index: 3, kind: output, shape index: {}]
  %s4 = sld [smem:[#allocation0]]
  $region26: #{tpu_custom_call.1} parent=0
    _
  %s6 = ssub.s32 1, %s4
  %s7 = scalar_select 0, %s6, %s4
  $region1: #{tpu_custom_call.1} parent=0
    #allocation2 [shape = 'u8[8192]{0}', space=vmem, size = 0x2000, scoped, tag = 'input window, operand 0, single buffered']
    #allocation3 [shape = 's32[1]{0}', space=sflag, size = 0x4, scoped, tag = 'scoped memory for tpu_custom_call.1']
    #allocation4 [shape = 's32[1]{0}', space=sflag, size = 0x4, scoped, tag = 'scoped memory for tpu_custom_call.1']
    #allocation5 [shape = 'u8[8192]{0}', space=vmem, size = 0x2000, scoped, tag = 'output window, operand 0, single buffered']
    %8 = vsyncpa [#allocation3], 0
    %9 = vsyncpa [#allocation4], 0
    // Predicated region
    $region2: #{tpu_custom_call.1} parent=1 // pred_check
      _
    $region3: #{tpu_custom_call.1} parent=1 // pred_check_branch
      %11 = sbr.rel (0) target = $region5
    $region4: #{tpu_custom_call.1} parent=1 // pred_region
      %s13 = ssub.s32 256, 256
      %14 = vsyncadd [#allocation3], %s13
      %s15 = sshll.u32 [#allocation2], 4
      %s16 = int_to_ptr.vmem [resolvable:$true] %s15
      %21 = dma.hbm_to_vmem [thread:$0]  %s0, 256, %s16, [#allocation3], 128, 128, 8
    $region5: #{tpu_custom_call.1} parent=1 // pred_fallthru
      _
    // Predicated region
    $region6: #{tpu_custom_call.1} parent=1 // pred_check
      _
    $region7: #{tpu_custom_call.1} parent=1 // pred_check_branch
      %23 = sbr.rel (0) target = $region9
    $region8: #{tpu_custom_call.1} parent=1 // pred_region
      _
    $region9: #{tpu_custom_call.1} parent=1 // pred_fallthru
      _
    // Predicated region
    $region10: #{tpu_custom_call.1} parent=1 // pred_check
      _
    $region11: #{tpu_custom_call.1} parent=1 // pred_check_branch
      %25 = sbr.rel (0) target = $region13
    $region12: #{tpu_custom_call.1} parent=1 // pred_region
      _
    $region13: #{tpu_custom_call.1} parent=1 // pred_fallthru
      _
    // Predicated region
    $region14: #{tpu_custom_call.1} parent=1 // pred_check
      _
    $region15: #{tpu_custom_call.1} parent=1 // pred_check_branch
      %27 = sbr.rel (0) target = $region17
    $region16: #{tpu_custom_call.1} parent=1 // pred_region
      %28 = dma.done [#allocation3], 256
    $region17: #{tpu_custom_call.1} parent=1 // pred_fallthru
      _
    %v29 = vld [vmem:[#allocation2] sm:$0xff]
    %v30 = vld [vmem:[#allocation2 + $0x8] sm:$0xff]
    %31 = vadd.xlane.f32.xlu0 %v29
    %v32 = vpop.xlane.xlu0 %31
    %33 = vadd.xlane.f32.xlu0 %v30
    %v34 = vpop.xlane.xlu0 %33
    %v35 = vrcp.pop 128.0
    %v36 = vmul.f32 %v32, %v35
    %v37 = vmul.f32 %v34, %v35
    %v38 = vsub.f32 %v29, %v36
    %v39 = vsub.f32 %v30, %v37
    %v40 = vmul.f32 %v38, %v38
    %v41 = vmul.f32 %v39, %v39
    %42 = vadd.xlane.f32.xlu0 %v40
    %v43 = vpop.xlane.xlu0 %42
    %44 = vadd.xlane.f32.xlu0 %v41
    %v45 = vpop.xlane.xlu0 %44
    %v46 = vmul.f32 %v43, 0.007874016
    %v47 = vmul.f32 %v45, 0.007874016
    %v48 = vrsqrt.pop %v46
    %v49 = vmul.f32 %v46, %v48
    %vm50 = vcmp.eq.f32.partialorder %v46, inf
    %v51 = vsel %vm50, %v46, %v49
    %vm52 = vcmp.eq.f32.partialorder %v46, 0.0
    %v53 = vand.u32 %v46, 2147483648
    %v54 = vsel %vm52, %v53, %v51
    %v55 = vrsqrt.pop %v47
    %v56 = vmul.f32 %v47, %v55
    %vm57 = vcmp.eq.f32.partialorder %v47, inf
    %v58 = vsel %vm57, %v47, %v56
    %vm59 = vcmp.eq.f32.partialorder %v47, 0.0
    %v60 = vand.u32 %v47, 2147483648
    %v61 = vsel %vm59, %v60, %v58
    %v62 = vadd.f32 %v54, 1e-06
    %v63 = vadd.f32 %v61, 1e-06
    %v64 = vrcp.pop %v62
    %v65 = vmul.f32 1.0, %v64
    %v66 = vrcp.pop %v63
    %v67 = vmul.f32 1.0, %v66
    %v68 = vld [vmem:[%s1] sm:$0x1]
    %v69 = vmul.f32 %v38, %v65
    %v70 = vmul.f32 %v39, %v67
    %v72 = vlaneseq
    %v73 = vshrl.u32 %v72, 7
    %v74 = vsub.s32 0, %v73
    %v75 = vrot.slane %v68, %v74
    %v77 = vmul.f32 %v75, %v69
    %v78 = vmul.f32 %v75, %v70
    %v79 = vld [vmem:[%s2] sm:$0x1]
    %v81 = vlaneseq
    %v82 = vshrl.u32 %v81, 7
    %v83 = vsub.s32 0, %v82
    %v84 = vrot.slane %v79, %v83
    %v86 = vadd.f32 %v77, %v84
    %v87 = vadd.f32 %v78, %v84
    %88 = vst [vmem:[#allocation5] sm:$0xff] %v86
    %89 = vst [vmem:[#allocation5 + $0x8] sm:$0xff] %v87
    // Predicated region
    $region18: #{tpu_custom_call.1} parent=1 // pred_check
      _
    $region19: #{tpu_custom_call.1} parent=1 // pred_check_branch
      %91 = sbr.rel (0) target = $region21
    $region20: #{tpu_custom_call.1} parent=1 // pred_region
      %s93 = ssub.s32 256, 256
      %94 = vsyncadd [#allocation4], %s93
      %s95 = sshll.u32 [#allocation5], 4
      %s96 = int_to_ptr.vmem [resolvable:$true] %s95
      %101 = dma.vmem_to_hbm [thread:$0]  %s96, 256, %s3, [#allocation4], 128, 128, 8
    $region21: #{tpu_custom_call.1} parent=1 // pred_fallthru
      _
    // Predicated region
    $region22: #{tpu_custom_call.1} parent=1 // pred_check
      _
    $region23: #{tpu_custom_call.1} parent=1 // pred_check_branch
      %103 = sbr.rel (0) target = $region25
    $region24: #{tpu_custom_call.1} parent=1 // pred_region
      %104 = dma.done [#allocation4], 256
    $region25: #{tpu_custom_call.1} parent=1 // pred_fallthru
      _
    %105 = vsyncpa [#allocation3], 1
    %106 = vsyncpa [#allocation4], 1

</llo_original>
